<compile_context>
chip_gen: v7x
topology: tpu7x:2x2x1
jax: 0.10.0
libtpu: 0.0.40
codegen_flags: <defaults>
</compile_context>

<pallas_src>
import functools

import jax
import jax.numpy as jnp
from jax.experimental import pallas as pl
from jax.experimental.pallas import tpu as pltpu

EPS = 1e-5  # nn.InstanceNorm2d default eps


def _residual_block_kernel(xflat_ref, mask_ref, w1t_ref, g1_ref, b1_ref,
                           w2t_ref, g2_ref, b2_ref, out_ref, ypad_ref,
                           *, H, W, Wp, C, d, compute_dtype):
    """Processes one batch element (grid axis 0 = batch, 'parallel').

    xflat_ref : (1, C, Lp)   zero-padded input, spatial dims flattened;
                             Lp = (H+2d)*(W+2d) + 2d (trailing slack for taps)
    mask_ref  : (1, HWp)     1.0 on valid columns (j < W), 0.0 on garbage cols
    w*t_ref   : (C, 9*C)     transposed conv weights, (kh, kw, ci) along K
    g*/b*     : (C, 1)       InstanceNorm affine params (f32)
    out_ref   : (1, C, HWp)  lane-dense channel-major output (extended width)
    ypad_ref  : (C, Lp)      VMEM scratch holding the zero-padded conv1 output
    """
    HWp = H * Wp
    lead = d * Wp + d                        # flat offset of spatial (0, 0)
    Lp = ypad_ref.shape[1]
    inv_n = 1.0 / float(H * W)
    mask = mask_ref[...]                     # (1, HWp) f32

    def conv3x3(get_slab, wt_ref):
        # Fused-tap conv: wT (C, 9C) @ patch (9C, HWp), f32 accumulation on MXU.
        # Each tap is a contiguous lane slice at a static offset; taps are cast
        # to the compute dtype BEFORE the concat.
        taps = [get_slab(kh * d * Wp + kw * d).astype(compute_dtype)
                for kh in range(3) for kw in range(3)]
        patch = jnp.concatenate(taps, axis=0)                 # (9C, HWp)
        return jnp.dot(wt_ref[...], patch,
                       preferred_element_type=jnp.float32)    # (C, HWp) f32

    def instance_norm(y, g_ref, b_ref):
        # Single-pass stats over the VALID spatial positions only, folded into
        # one scale + bias per channel.
        ym = y * mask                                          # zero garbage cols
        mean = jnp.sum(ym, axis=1, keepdims=True) * inv_n      # (C, 1)
        ex2 = jnp.sum(ym * y, axis=1, keepdims=True) * inv_n   # (C, 1)
        var = ex2 - mean * mean                                # biased var
        scale = g_ref[...] * jax.lax.rsqrt(var + EPS)
        bias = b_ref[...] - mean * scale
        return y * scale + bias

    # ---- conv1 -> norm1 -> relu (garbage columns zeroed so conv2 sees padding) ----
    y1 = conv3x3(lambda off: xflat_ref[0, :, off:off + HWp], w1t_ref)
    y1 = jnp.maximum(instance_norm(y1, g1_ref, b1_ref), 0.0) * mask

    # ---- write zero-padded y1 into the persistent scratch ----
    # Borders are re-zeroed every step (tiny: d*Wp+d lanes each side).
    trail = Lp - lead - HWp
    ypad_ref[:, :lead] = jnp.zeros((C, lead), jnp.float32)
    ypad_ref[:, lead:lead + HWp] = y1
    ypad_ref[:, lead + HWp:] = jnp.zeros((C, trail), jnp.float32)

    # ---- conv2 -> norm2 ----
    y2 = conv3x3(lambda off: ypad_ref[:, off:off + HWp], w2t_ref)
    y2 = instance_norm(y2, g2_ref, b2_ref)

    # ---- residual (centre tap of the padded input) + relu, lane-dense store ----
    x_res = xflat_ref[0, :, lead:lead + HWp].astype(jnp.float32)
    out_ref[0] = jnp.maximum(x_res + y2, 0.0).astype(out_ref.dtype)


def residual_block(x_nchw, params, dilation=1, compute_dtype=jnp.bfloat16,
                   out_dtype=jnp.float32):
    """Pallas implementation of ResidualBlock.forward.  Input/output are NCHW.

    compute_dtype controls the conv matmul operand dtype AND the dtype the padded
    input is shipped in (accumulation / norm math is always f32); pass jnp.float32
    for bit-tight numerics.  out_dtype=jnp.bfloat16 halves output writeback.
    """
    w1, g1, b1, w2, g2, b2 = params          # w*: HWIO (3,3,C,C); g*/b*: (C,)
    N, C, H, W = x_nchw.shape
    d = dilation
    Hp, Wp = H + 2 * d, W + 2 * d
    HWp = H * Wp
    Lp = Hp * Wp + 2 * d                     # trailing slack for the last tap

    # Input stays NCHW (no transpose pass).  Zero-pad spatially, flatten spatial
    # dims onto one lane axis, add 2d trailing slack, ship in the compute dtype.
    xpad = jnp.pad(x_nchw.astype(compute_dtype),
                   ((0, 0), (0, 0), (d, d), (d, d)))
    xflat = jnp.pad(xpad.reshape(N, C, Hp * Wp), ((0, 0), (0, 0), (0, 2 * d)))

    # Valid-column mask over the (H, Wp) extended output grid.
    mask = ((jnp.arange(HWp) % Wp) < W).astype(jnp.float32).reshape(1, HWp)

    # Weights HWIO (3,3,Ci,Co) -> (Co, 9*Ci); column order (kh, kw, ci) matches
    # the in-kernel tap-concat order.
    w1t = w1.reshape(9 * C, C).T.astype(compute_dtype)
    w2t = w2.reshape(9 * C, C).T.astype(compute_dtype)
    g1v = g1.reshape(C, 1).astype(jnp.float32)
    b1v = b1.reshape(C, 1).astype(jnp.float32)
    g2v = g2.reshape(C, 1).astype(jnp.float32)
    b2v = b2.reshape(C, 1).astype(jnp.float32)

    kernel = functools.partial(_residual_block_kernel, H=H, W=W, Wp=Wp, C=C,
                               d=d, compute_dtype=compute_dtype)

    w_spec = pl.BlockSpec((C, 9 * C), lambda i: (0, 0))
    v_spec = pl.BlockSpec((C, 1), lambda i: (0, 0))

    # Generation-aware VMEM budget: blocks + scratch + live temporaries with 2x
    # headroom, capped at 85% of physical VMEM (v7x has only 64 MiB), floor 32 MiB.
    try:
        vmem_cap = int(getattr(pltpu.get_tpu_info(), "vmem_capacity_bytes",
                               64 * 2 ** 20))
    except Exception:  # pragma: no cover - defensive fallback
        vmem_cap = 64 * 2 ** 20
    cd = jnp.dtype(compute_dtype).itemsize
    od = jnp.dtype(out_dtype).itemsize
    est = (2 * C * Lp * cd                 # xflat block (x2 pipeline buffers)
           + 2 * C * HWp * od              # out block   (x2)
           + 2 * 2 * 9 * C * C * cd        # conv weights (x2 each)
           + 2 * (HWp + 2 * C) * 4         # mask + affine params (x2)
           + C * Lp * 4                    # ypad scratch
           + 2 * 9 * C * HWp * cd          # im2col patch matrices
           + 6 * C * HWp * 4)              # f32 activation slabs / temporaries
    vmem_limit = int(min(0.85 * vmem_cap, max(32 * 2 ** 20, 2 * est)))

    out = pl.pallas_call(
        kernel,
        out_shape=jax.ShapeDtypeStruct((N, C, HWp), out_dtype),
        grid_spec=pltpu.PrefetchScalarGridSpec(
            num_scalar_prefetch=0,
            grid=(N,),
            in_specs=[
                pl.BlockSpec((1, C, Lp), lambda i: (i, 0, 0)),   # xflat
                pl.BlockSpec((1, HWp), lambda i: (0, 0)),        # mask
                w_spec, v_spec, v_spec,                          # conv1 / norm1
                w_spec, v_spec, v_spec,                          # conv2 / norm2
            ],
            out_specs=pl.BlockSpec((1, C, HWp), lambda i: (i, 0, 0)),
            scratch_shapes=[pltpu.VMEM((C, Lp), jnp.float32)],
        ),
        compiler_params=pltpu.CompilerParams(
            dimension_semantics=("parallel",),
            vmem_limit_bytes=vmem_limit),
    )(xflat, mask, w1t, g1v, b1v, w2t, g2v, b2v)

    # Strip the Wp-W garbage columns; layout is already NCHW.
    return out.reshape(N, C, H, Wp)[:, :, :, :W]


def residual_block_reference(x_nchw, params, dilation=1):
    """Plain-JAX reference (matches PyTorch semantics) used for validation."""
    w1, g1, b1, w2, g2, b2 = params
    d = dilation
    x = jnp.transpose(x_nchw, (0, 2, 3, 1)).astype(jnp.float32)

    def conv(z, w):
        return jax.lax.conv_general_dilated(
            z, w, window_strides=(1, 1), padding=[(d, d), (d, d)],
            rhs_dilation=(d, d),
            dimension_numbers=('NHWC', 'HWIO', 'NHWC'))

    def inorm(z, g, b):
        mean = jnp.mean(z, axis=(1, 2), keepdims=True)
        var = jnp.mean((z - mean) ** 2, axis=(1, 2), keepdims=True)
        return (z - mean) * jax.lax.rsqrt(var + EPS) * g.reshape(1, 1, 1, -1) \
            + b.reshape(1, 1, 1, -1)

    y = jax.nn.relu(inorm(conv(x, w1), g1, b1))
    y = inorm(conv(y, w2), g2, b2)
    out = jax.nn.relu(x + y)
    return jnp.transpose(out, (0, 3, 1, 2))


def init_params(key, channel_num):
    """Deterministic synthetic parameters (shapes from ResidualBlock.__init__)."""
    C = channel_num
    k1, k2, k3, k4, k5, k6 = jax.random.split(key, 6)
    # PyTorch conv weight is OIHW (C, C, 3, 3); convert to HWIO for the kernel.
    w1 = jnp.transpose(0.1 * jax.random.normal(k1, (C, C, 3, 3), jnp.float32),
                       (2, 3, 1, 0))
    w2 = jnp.transpose(0.1 * jax.random.normal(k2, (C, C, 3, 3), jnp.float32),
                       (2, 3, 1, 0))
    g1 = 1.0 + 0.1 * jax.random.normal(k3, (C,), jnp.float32)
    b1 = 0.1 * jax.random.normal(k4, (C,), jnp.float32)
    g2 = 1.0 + 0.1 * jax.random.normal(k5, (C,), jnp.float32)
    b2 = 0.1 * jax.random.normal(k6, (C,), jnp.float32)
    return (w1, g1, b1, w2, g2, b2)


if __name__ == "__main__":
    N, C, H, W = 2, 8, 16, 16
    dilation = 1

    key = jax.random.PRNGKey(0)
    kx, kp = jax.random.split(key)
    x = jax.random.normal(kx, (N, C, H, W), jnp.float32)
    params = init_params(kp, C)

    ref = residual_block_reference(x, params, dilation=dilation)

    # Exact-math path (f32 input + f32 matmul operands): tight tolerance.
    out_f32 = jax.block_until_ready(
        residual_block(x, params, dilation=dilation, compute_dtype=jnp.float32))
    assert out_f32.shape == (N, C, H, W)
    assert jnp.allclose(out_f32, ref, atol=1e-4, rtol=1e-4), \
        f"f32 max abs err = {jnp.max(jnp.abs(out_f32 - ref))}"

    # Default path (bf16 input + bf16 MXU operands, f32 accumulation).
    out = jax.block_until_ready(residual_block(x, params, dilation=dilation))
    assert out.shape == (N, C, H, W)
    assert jnp.allclose(out, ref, atol=1e-1, rtol=5e-2), \
        f"bf16 max abs err = {jnp.max(jnp.abs(out - ref))}"

    print("KERNEL_OK")
</pallas_src>

<mosaic_0001>
module attributes {stable_mosaic.version = 11 : i64} {
  func.func @_residual_block_kernel(%arg0: i32, %arg1: memref<1x8x326xf32, #tpu.memory_space<vmem>>, %arg2: memref<1x288xf32, #tpu.memory_space<vmem>>, %arg3: memref<8x72xf32, #tpu.memory_space<vmem>>, %arg4: memref<8x1xf32, #tpu.memory_space<vmem>>, %arg5: memref<8x1xf32, #tpu.memory_space<vmem>>, %arg6: memref<8x72xf32, #tpu.memory_space<vmem>>, %arg7: memref<8x1xf32, #tpu.memory_space<vmem>>, %arg8: memref<8x1xf32, #tpu.memory_space<vmem>>, %arg9: memref<1x8x288xf32, #tpu.memory_space<vmem>>, %arg10: memref<8x326xf32, #tpu.memory_space<vmem>>) attributes {dimension_semantics = [#tpu.dimension_semantics<parallel>], iteration_bounds = array<i64: 2>, scalar_prefetch = 0 : i64, scratch_operands = 1 : i64, tpu.core_type = #tpu.core_type<tc>, window_params = [{transform_indices = @transform_0, window_bounds = array<i64: 1, 8, 326>}, {pipeline_mode = #tpu.pipeline_mode<synchronous>, transform_indices = @transform_1, window_bounds = array<i64: 1, 288>}, {pipeline_mode = #tpu.pipeline_mode<synchronous>, transform_indices = @transform_2, window_bounds = array<i64: 8, 72>}, {pipeline_mode = #tpu.pipeline_mode<synchronous>, transform_indices = @transform_3, window_bounds = array<i64: 8, 1>}, {pipeline_mode = #tpu.pipeline_mode<synchronous>, transform_indices = @transform_4, window_bounds = array<i64: 8, 1>}, {pipeline_mode = #tpu.pipeline_mode<synchronous>, transform_indices = @transform_5, window_bounds = array<i64: 8, 72>}, {pipeline_mode = #tpu.pipeline_mode<synchronous>, transform_indices = @transform_6, window_bounds = array<i64: 8, 1>}, {pipeline_mode = #tpu.pipeline_mode<synchronous>, transform_indices = @transform_7, window_bounds = array<i64: 8, 1>}, {transform_indices = @transform_8, window_bounds = array<i64: 1, 8, 288>}]} {
    %c0 = arith.constant 0 : index
    %c0_0 = arith.constant 0 : index
    %0 = vector.load %arg2[%c0, %c0_0] : memref<1x288xf32, #tpu.memory_space<vmem>>, vector<1x288xf32>
    %c0_1 = arith.constant 0 : index
    %c0_2 = arith.constant 0 : index
    %c0_3 = arith.constant 0 : index
    %1 = vector.load %arg1[%c0_1, %c0_2, %c0_3] : memref<1x8x326xf32, #tpu.memory_space<vmem>>, vector<1x8x288xf32>
    %2 = vector.shape_cast %1 : vector<1x8x288xf32> to vector<8x288xf32>
    %c0_4 = arith.constant 0 : index
    %c0_5 = arith.constant 0 : index
    %c1 = arith.constant 1 : index
    %3 = vector.load %arg1[%c0_4, %c0_5, %c1] : memref<1x8x326xf32, #tpu.memory_space<vmem>>, vector<1x8x288xf32>
    %4 = vector.shape_cast %3 : vector<1x8x288xf32> to vector<8x288xf32>
    %c0_6 = arith.constant 0 : index
    %c0_7 = arith.constant 0 : index
    %c2 = arith.constant 2 : index
    %5 = vector.load %arg1[%c0_6, %c0_7, %c2] : memref<1x8x326xf32, #tpu.memory_space<vmem>>, vector<1x8x288xf32>
    %6 = vector.shape_cast %5 : vector<1x8x288xf32> to vector<8x288xf32>
    %c0_8 = arith.constant 0 : index
    %c0_9 = arith.constant 0 : index
    %c18 = arith.constant 18 : index
    %7 = vector.load %arg1[%c0_8, %c0_9, %c18] : memref<1x8x326xf32, #tpu.memory_space<vmem>>, vector<1x8x288xf32>
    %8 = vector.shape_cast %7 : vector<1x8x288xf32> to vector<8x288xf32>
    %c0_10 = arith.constant 0 : index
    %c0_11 = arith.constant 0 : index
    %c19 = arith.constant 19 : index
    %9 = vector.load %arg1[%c0_10, %c0_11, %c19] : memref<1x8x326xf32, #tpu.memory_space<vmem>>, vector<1x8x288xf32>
    %10 = vector.shape_cast %9 : vector<1x8x288xf32> to vector<8x288xf32>
    %c0_12 = arith.constant 0 : index
    %c0_13 = arith.constant 0 : index
    %c20 = arith.constant 20 : index
    %11 = vector.load %arg1[%c0_12, %c0_13, %c20] : memref<1x8x326xf32, #tpu.memory_space<vmem>>, vector<1x8x288xf32>
    %12 = vector.shape_cast %11 : vector<1x8x288xf32> to vector<8x288xf32>
    %c0_14 = arith.constant 0 : index
    %c0_15 = arith.constant 0 : index
    %c36 = arith.constant 36 : index
    %13 = vector.load %arg1[%c0_14, %c0_15, %c36] : memref<1x8x326xf32, #tpu.memory_space<vmem>>, vector<1x8x288xf32>
    %14 = vector.shape_cast %13 : vector<1x8x288xf32> to vector<8x288xf32>
    %c0_16 = arith.constant 0 : index
    %c0_17 = arith.constant 0 : index
    %c37 = arith.constant 37 : index
    %15 = vector.load %arg1[%c0_16, %c0_17, %c37] : memref<1x8x326xf32, #tpu.memory_space<vmem>>, vector<1x8x288xf32>
    %16 = vector.shape_cast %15 : vector<1x8x288xf32> to vector<8x288xf32>
    %c0_18 = arith.constant 0 : index
    %c0_19 = arith.constant 0 : index
    %c38 = arith.constant 38 : index
    %17 = vector.load %arg1[%c0_18, %c0_19, %c38] : memref<1x8x326xf32, #tpu.memory_space<vmem>>, vector<1x8x288xf32>
    %18 = vector.shape_cast %17 : vector<1x8x288xf32> to vector<8x288xf32>
    %19 = tpu.concatenate %2, %4, %6, %8, %10, %12, %14, %16, %18 in 0 : vector<8x288xf32>, vector<8x288xf32>, vector<8x288xf32>, vector<8x288xf32>, vector<8x288xf32>, vector<8x288xf32>, vector<8x288xf32>, vector<8x288xf32>, vector<8x288xf32> -> vector<72x288xf32>
    %c0_20 = arith.constant 0 : index
    %c0_21 = arith.constant 0 : index
    %20 = vector.load %arg3[%c0_20, %c0_21] : memref<8x72xf32, #tpu.memory_space<vmem>>, vector<8x72xf32>
    %cst = arith.constant dense<0.000000e+00> : vector<8x288xf32>
    %21 = tpu.matmul %20, %19, %cst {dimension_numbers = #tpu.dot_dimension_numbers<[1], [0], [0], [1], [0, 0, 1, 1], [], []>} : vector<8x72xf32>, vector<72x288xf32>, vector<8x288xf32> -> vector<8x288xf32>
    %22 = vector.broadcast %0 : vector<1x288xf32> to vector<8x288xf32>
    %23 = arith.mulf %21, %22 : vector<8x288xf32>
    %cst_22 = arith.constant dense<0.000000e+00> : vector<8xf32>
    %24 = vector.multi_reduction <add>, %23, %cst_22 [1] : vector<8x288xf32> to vector<8xf32>
    %25 = vector.shape_cast %24 : vector<8xf32> to vector<8x1xf32>
    %cst_23 = arith.constant 3.906250e-03 : f32
    %26 = vector.broadcast %cst_23 : f32 to vector<8x1xf32>
    %27 = arith.mulf %25, %26 : vector<8x1xf32>
    %28 = arith.mulf %23, %21 : vector<8x288xf32>
    %cst_24 = arith.constant dense<0.000000e+00> : vector<8xf32>
    %29 = vector.multi_reduction <add>, %28, %cst_24 [1] : vector<8x288xf32> to vector<8xf32>
    %30 = vector.shape_cast %29 : vector<8xf32> to vector<8x1xf32>
    %cst_25 = arith.constant 3.906250e-03 : f32
    %31 = vector.broadcast %cst_25 : f32 to vector<8x1xf32>
    %32 = arith.mulf %30, %31 : vector<8x1xf32>
    %33 = arith.mulf %27, %27 : vector<8x1xf32>
    %34 = arith.subf %32, %33 : vector<8x1xf32>
    %c0_26 = arith.constant 0 : index
    %c0_27 = arith.constant 0 : index
    %35 = vector.load %arg4[%c0_26, %c0_27] : memref<8x1xf32, #tpu.memory_space<vmem>>, vector<8x1xf32>
    %cst_28 = arith.constant 9.99999974E-6 : f32
    %36 = vector.broadcast %cst_28 : f32 to vector<8x1xf32>
    %37 = arith.addf %34, %36 : vector<8x1xf32>
    %38 = math.rsqrt %37 : vector<8x1xf32>
    %39 = arith.mulf %35, %38 : vector<8x1xf32>
    %c0_29 = arith.constant 0 : index
    %c0_30 = arith.constant 0 : index
    %40 = vector.load %arg5[%c0_29, %c0_30] : memref<8x1xf32, #tpu.memory_space<vmem>>, vector<8x1xf32>
    %41 = arith.mulf %27, %39 : vector<8x1xf32>
    %42 = arith.subf %40, %41 : vector<8x1xf32>
    %43 = vector.broadcast %39 : vector<8x1xf32> to vector<8x288xf32>
    %44 = arith.mulf %21, %43 : vector<8x288xf32>
    %45 = vector.broadcast %42 : vector<8x1xf32> to vector<8x288xf32>
    %46 = arith.addf %44, %45 : vector<8x288xf32>
    %cst_31 = arith.constant 0.000000e+00 : f32
    %47 = vector.broadcast %cst_31 : f32 to vector<8x288xf32>
    %48 = arith.maximumf %46, %47 : vector<8x288xf32>
    %49 = vector.broadcast %0 : vector<1x288xf32> to vector<8x288xf32>
    %50 = arith.mulf %48, %49 : vector<8x288xf32>
    %cst_32 = arith.constant 0.000000e+00 : f32
    %51 = vector.broadcast %cst_32 : f32 to vector<8x19xf32>
    %c0_33 = arith.constant 0 : index
    %c0_34 = arith.constant 0 : index
    %52 = vector.load %arg10[%c0_33, %c0_34] : memref<8x326xf32, #tpu.memory_space<vmem>>, vector<8x19xf32>
    tpu.vector_store %arg10[%c0_33, %c0_34], %51 {strides = array<i32>} : memref<8x326xf32, #tpu.memory_space<vmem>>, vector<8x19xf32>,
    %c0_35 = arith.constant 0 : index
    %c19_36 = arith.constant 19 : index
    %53 = vector.load %arg10[%c0_35, %c19_36] : memref<8x326xf32, #tpu.memory_space<vmem>>, vector<8x288xf32>
    tpu.vector_store %arg10[%c0_35, %c19_36], %50 {strides = array<i32>} : memref<8x326xf32, #tpu.memory_space<vmem>>, vector<8x288xf32>,
    %cst_37 = arith.constant 0.000000e+00 : f32
    %54 = vector.broadcast %cst_37 : f32 to vector<8x19xf32>
    %c0_38 = arith.constant 0 : index
    %c307 = arith.constant 307 : index
    %55 = vector.load %arg10[%c0_38, %c307] : memref<8x326xf32, #tpu.memory_space<vmem>>, vector<8x19xf32>
    tpu.vector_store %arg10[%c0_38, %c307], %54 {strides = array<i32>} : memref<8x326xf32, #tpu.memory_space<vmem>>, vector<8x19xf32>,
    %c0_39 = arith.constant 0 : index
    %c0_40 = arith.constant 0 : index
    %56 = vector.load %arg10[%c0_39, %c0_40] : memref<8x326xf32, #tpu.memory_space<vmem>>, vector<8x288xf32>
    %c0_41 = arith.constant 0 : index
    %c1_42 = arith.constant 1 : index
    %57 = vector.load %arg10[%c0_41, %c1_42] : memref<8x326xf32, #tpu.memory_space<vmem>>, vector<8x288xf32>
    %c0_43 = arith.constant 0 : index
    %c2_44 = arith.constant 2 : index
    %58 = vector.load %arg10[%c0_43, %c2_44] : memref<8x326xf32, #tpu.memory_space<vmem>>, vector<8x288xf32>
    %c0_45 = arith.constant 0 : index
    %c18_46 = arith.constant 18 : index
    %59 = vector.load %arg10[%c0_45, %c18_46] : memref<8x326xf32, #tpu.memory_space<vmem>>, vector<8x288xf32>
    %c0_47 = arith.constant 0 : index
    %c19_48 = arith.constant 19 : index
    %60 = vector.load %arg10[%c0_47, %c19_48] : memref<8x326xf32, #tpu.memory_space<vmem>>, vector<8x288xf32>
    %c0_49 = arith.constant 0 : index
    %c20_50 = arith.constant 20 : index
    %61 = vector.load %arg10[%c0_49, %c20_50] : memref<8x326xf32, #tpu.memory_space<vmem>>, vector<8x288xf32>
    %c0_51 = arith.constant 0 : index
    %c36_52 = arith.constant 36 : index
    %62 = vector.load %arg10[%c0_51, %c36_52] : memref<8x326xf32, #tpu.memory_space<vmem>>, vector<8x288xf32>
    %c0_53 = arith.constant 0 : index
    %c37_54 = arith.constant 37 : index
    %63 = vector.load %arg10[%c0_53, %c37_54] : memref<8x326xf32, #tpu.memory_space<vmem>>, vector<8x288xf32>
    %c0_55 = arith.constant 0 : index
    %c38_56 = arith.constant 38 : index
    %64 = vector.load %arg10[%c0_55, %c38_56] : memref<8x326xf32, #tpu.memory_space<vmem>>, vector<8x288xf32>
    %65 = tpu.concatenate %56, %57, %58, %59, %60, %61, %62, %63, %64 in 0 : vector<8x288xf32>, vector<8x288xf32>, vector<8x288xf32>, vector<8x288xf32>, vector<8x288xf32>, vector<8x288xf32>, vector<8x288xf32>, vector<8x288xf32>, vector<8x288xf32> -> vector<72x288xf32>
    %c0_57 = arith.constant 0 : index
    %c0_58 = arith.constant 0 : index
    %66 = vector.load %arg6[%c0_57, %c0_58] : memref<8x72xf32, #tpu.memory_space<vmem>>, vector<8x72xf32>
    %cst_59 = arith.constant dense<0.000000e+00> : vector<8x288xf32>
    %67 = tpu.matmul %66, %65, %cst_59 {dimension_numbers = #tpu.dot_dimension_numbers<[1], [0], [0], [1], [0, 0, 1, 1], [], []>} : vector<8x72xf32>, vector<72x288xf32>, vector<8x288xf32> -> vector<8x288xf32>
    %68 = vector.broadcast %0 : vector<1x288xf32> to vector<8x288xf32>
    %69 = arith.mulf %67, %68 : vector<8x288xf32>
    %cst_60 = arith.constant dense<0.000000e+00> : vector<8xf32>
    %70 = vector.multi_reduction <add>, %69, %cst_60 [1] : vector<8x288xf32> to vector<8xf32>
    %71 = vector.shape_cast %70 : vector<8xf32> to vector<8x1xf32>
    %cst_61 = arith.constant 3.906250e-03 : f32
    %72 = vector.broadcast %cst_61 : f32 to vector<8x1xf32>
    %73 = arith.mulf %71, %72 : vector<8x1xf32>
    %74 = arith.mulf %69, %67 : vector<8x288xf32>
    %cst_62 = arith.constant dense<0.000000e+00> : vector<8xf32>
    %75 = vector.multi_reduction <add>, %74, %cst_62 [1] : vector<8x288xf32> to vector<8xf32>
    %76 = vector.shape_cast %75 : vector<8xf32> to vector<8x1xf32>
    %cst_63 = arith.constant 3.906250e-03 : f32
    %77 = vector.broadcast %cst_63 : f32 to vector<8x1xf32>
    %78 = arith.mulf %76, %77 : vector<8x1xf32>
    %79 = arith.mulf %73, %73 : vector<8x1xf32>
    %80 = arith.subf %78, %79 : vector<8x1xf32>
    %c0_64 = arith.constant 0 : index
    %c0_65 = arith.constant 0 : index
    %81 = vector.load %arg7[%c0_64, %c0_65] : memref<8x1xf32, #tpu.memory_space<vmem>>, vector<8x1xf32>
    %cst_66 = arith.constant 9.99999974E-6 : f32
    %82 = vector.broadcast %cst_66 : f32 to vector<8x1xf32>
    %83 = arith.addf %80, %82 : vector<8x1xf32>
    %84 = math.rsqrt %83 : vector<8x1xf32>
    %85 = arith.mulf %81, %84 : vector<8x1xf32>
    %c0_67 = arith.constant 0 : index
    %c0_68 = arith.constant 0 : index
    %86 = vector.load %arg8[%c0_67, %c0_68] : memref<8x1xf32, #tpu.memory_space<vmem>>, vector<8x1xf32>
    %87 = arith.mulf %73, %85 : vector<8x1xf32>
    %88 = arith.subf %86, %87 : vector<8x1xf32>
    %89 = vector.broadcast %85 : vector<8x1xf32> to vector<8x288xf32>
    %90 = arith.mulf %67, %89 : vector<8x288xf32>
    %91 = vector.broadcast %88 : vector<8x1xf32> to vector<8x288xf32>
    %92 = arith.addf %90, %91 : vector<8x288xf32>
    %c0_69 = arith.constant 0 : index
    %c0_70 = arith.constant 0 : index
    %c19_71 = arith.constant 19 : index
    %93 = vector.load %arg1[%c0_69, %c0_70, %c19_71] : memref<1x8x326xf32, #tpu.memory_space<vmem>>, vector<1x8x288xf32>
    %94 = vector.shape_cast %93 : vector<1x8x288xf32> to vector<8x288xf32>
    %95 = arith.addf %94, %92 : vector<8x288xf32>
    %cst_72 = arith.constant 0.000000e+00 : f32
    %96 = vector.broadcast %cst_72 : f32 to vector<8x288xf32>
    %97 = arith.maximumf %95, %96 : vector<8x288xf32>
    %c0_73 = arith.constant 0 : index
    %c0_74 = arith.constant 0 : index
    %c0_75 = arith.constant 0 : index
    %98 = vector.load %arg9[%c0_73, %c0_74, %c0_75] : memref<1x8x288xf32, #tpu.memory_space<vmem>>, vector<1x8x288xf32>
    %99 = vector.shape_cast %98 : vector<1x8x288xf32> to vector<8x288xf32>
    %100 = vector.shape_cast %97 : vector<8x288xf32> to vector<1x8x288xf32>
    tpu.vector_store %arg9[%c0_73, %c0_74, %c0_75], %100 {strides = array<i32>} : memref<1x8x288xf32, #tpu.memory_space<vmem>>, vector<1x8x288xf32>,
    return
  }
  func.func @transform_0(%arg0: i32) -> (i32, i32, i32) {
    %c0_i32 = arith.constant 0 : i32
    %c0_i32_0 = arith.constant 0 : i32
    %c0_i32_1 = arith.constant 0 : i32
    return %arg0, %c0_i32, %c0_i32_0 : i32, i32, i32
  }
  func.func @transform_1(%arg0: i32) -> (i32, i32) {
    %c0_i32 = arith.constant 0 : i32
    %c0_i32_0 = arith.constant 0 : i32
    %c0_i32_1 = arith.constant 0 : i32
    return %c0_i32, %c0_i32_0 : i32, i32
  }
  func.func @transform_2(%arg0: i32) -> (i32, i32) {
    %c0_i32 = arith.constant 0 : i32
    %c0_i32_0 = arith.constant 0 : i32
    %c0_i32_1 = arith.constant 0 : i32
    return %c0_i32, %c0_i32_0 : i32, i32
  }
  func.func @transform_3(%arg0: i32) -> (i32, i32) {
    %c0_i32 = arith.constant 0 : i32
    %c0_i32_0 = arith.constant 0 : i32
    %c0_i32_1 = arith.constant 0 : i32
    return %c0_i32, %c0_i32_0 : i32, i32
  }
  func.func @transform_4(%arg0: i32) -> (i32, i32) {
    %c0_i32 = arith.constant 0 : i32
    %c0_i32_0 = arith.constant 0 : i32
    %c0_i32_1 = arith.constant 0 : i32
    return %c0_i32, %c0_i32_0 : i32, i32
  }
  func.func @transform_5(%arg0: i32) -> (i32, i32) {
    %c0_i32 = arith.constant 0 : i32
    %c0_i32_0 = arith.constant 0 : i32
    %c0_i32_1 = arith.constant 0 : i32
    return %c0_i32, %c0_i32_0 : i32, i32
  }
  func.func @transform_6(%arg0: i32) -> (i32, i32) {
    %c0_i32 = arith.constant 0 : i32
    %c0_i32_0 = arith.constant 0 : i32
    %c0_i32_1 = arith.constant 0 : i32
    return %c0_i32, %c0_i32_0 : i32, i32
  }
  func.func @transform_7(%arg0: i32) -> (i32, i32) {
    %c0_i32 = arith.constant 0 : i32
    %c0_i32_0 = arith.constant 0 : i32
    %c0_i32_1 = arith.constant 0 : i32
    return %c0_i32, %c0_i32_0 : i32, i32
  }
  func.func @transform_8(%arg0: i32) -> (i32, i32, i32) {
    %c0_i32 = arith.constant 0 : i32
    %c0_i32_0 = arith.constant 0 : i32
    %c0_i32_1 = arith.constant 0 : i32
    return %arg0, %c0_i32, %c0_i32_0 : i32, i32, i32
  }
}

</mosaic_0001>

<llo_original>
// kernel: tpu_custom_call.1
$region0: #{tpu_custom_call.1}
  #allocation0 [shape = 'u32[]', space=smem, size = 0x4, offset = 0x4, fixed_abs, tag = 'smem constant byte address 0x4 - core index']
  #allocation1 [shape = 'u32[144,128]{1,0:T(1,128)}', space=vmem, size = 0x12000, scoped, tag = 'internal scratch']
  #allocation2 [shape = 'f32[8,326]{1,0:T(8,128)}', space=vmem, size = 0x3000, scoped, tag = 'scratch operand']
  %s0 = inlined_call_operand.hbm [shape: f32[2,8,326], index: 0, kind: input, shape index: {}]
  %s1 = inlined_call_operand.vmem [shape: f32[1,288], index: 1, kind: input, shape index: {}]
  %s2 = inlined_call_operand.vmem [shape: f32[8,72], index: 2, kind: input, shape index: {}]
  %s3 = inlined_call_operand.vmem [shape: f32[8,1], index: 3, kind: input, shape index: {}]
  %s4 = inlined_call_operand.vmem [shape: f32[8,1], index: 4, kind: input, shape index: {}]
  %s5 = inlined_call_operand.vmem [shape: f32[8,72], index: 5, kind: input, shape index: {}]
  %s6 = inlined_call_operand.vmem [shape: f32[8,1], index: 6, kind: input, shape index: {}]
  %s7 = inlined_call_operand.vmem [shape: f32[8,1], index: 7, kind: input, shape index: {}]
  %s8 = inlined_call_operand.hbm [shape: f32[2,8,288], index: 8, kind: output, shape index: {}]
  %s9 = sld [smem:[#allocation0]]
  $region69: #{tpu_custom_call.1} parent=0
    _
  %s11 = ssub.s32 1, %s9
  %s12 = scalar_select 0, %s11, %s9
  $region1: #{tpu_custom_call.1} parent=0
    #allocation3 [shape = 'u8[24576]{0}', space=vmem, size = 0x6000, scoped, tag = 'input window, operand 0']
    #allocation4 [shape = 's32[2]{0}', space=sflag, size = 0x8, scoped, tag = 'scoped memory for tpu_custom_call.1']
    #allocation5 [shape = 's32[2]{0}', space=sflag, size = 0x8, scoped, tag = 'scoped memory for tpu_custom_call.1']
    #allocation6 [shape = 'u8[24576]{0}', space=vmem, size = 0x6000, scoped, tag = 'output window, operand 0']
    %13 = vsyncpa [#allocation4], 0
    %s14 = scalar_lea.sflag [#allocation4], 1
    %15 = vsyncpa %s14, 0
    %16 = vsyncpa [#allocation5], 0
    %s17 = scalar_lea.sflag [#allocation5], 1
    %18 = vsyncpa %s17, 0
    loop: start=0, step=1, limit=4
    $region2: #{tpu_custom_call.1} parent=1 // loop_pre_header
      _
    $region3: #{tpu_custom_call.1} parent=1 // loop_header
      %s20 = sphi 0, %s24
      %p21 = scmp.ge.s32.totalorder %s20, 4
      %s30 = sphi 0, %s32
      %s33 = sphi 0, %s30
      %s34 = sphi 0, %s33
      %s50 = sphi 0, %s34
      %s54 = sphi 0, %s54
      %s56 = sphi 0, %s54
      %s57 = sphi 0, %s56
      %s71 = sphi 0, %s57
      %s75 = sphi 0, %s75
      %s77 = sphi 0, %s75
      %s78 = sphi 0, %s77
      %s92 = sphi 0, %s78
      %s96 = sphi 0, %s96
      %s98 = sphi 0, %s96
      %s99 = sphi 0, %s98
      %s113 = sphi 0, %s99
      %s117 = sphi 0, %s117
      %s119 = sphi 0, %s117
      %s120 = sphi 0, %s119
      %s134 = sphi 0, %s120
      %s138 = sphi 0, %s138
      %s140 = sphi 0, %s138
      %s141 = sphi 0, %s140
      %s155 = sphi 0, %s141
      %s159 = sphi 0, %s159
      %s161 = sphi 0, %s159
      %s162 = sphi 0, %s161
      %s176 = sphi 0, %s162
      %s180 = sphi 0, %s180
      %s182 = sphi 0, %s180
      %s183 = sphi 0, %s182
      %s197 = sphi 0, %s183
      %s203 = sphi 0, %s205
      %s206 = sphi 0, %s203
      %s207 = sphi 0, %s206
      %s223 = sphi 0, %s207
    $region4: #{tpu_custom_call.1} parent=1 // loop_header_branch
      %23 = sbr.rel (%p21) target = $region8
    $region5: #{tpu_custom_call.1} parent=1 // loop_body
      %s25 = ssub.s32 %s20, 1
      %s26 = ssub.s32 %s20, 2
      %s27 = sadd.s32 %s20, 1
      %s28 = ssub.s32 %s20, %s27
      %p29 = scmp.eq.s32.totalorder %s28, 0
      %s31 = sadd.s32 %s30, 1
      %s32 = scalar_select %p29, %s30, %s31
      %p35 = pneg %p29
      %p36 = scmp.eq.s32.totalorder %s20, 1
      %p37 = por %p35, %p36
      %p38 = scmp.ne.s32.totalorder %s30, %s33
      %p39 = scmp.eq.s32.totalorder %s20, 0
      %p40 = por %p38, %p39
      %p41 = scmp.ne.s32.totalorder %s30, %s33
      %p42 = scmp.eq.s32.totalorder %s25, 1
      %p43 = por %p41, %p42
      %p44 = scmp.ne.s32.totalorder %s33, %s34
      %p45 = scmp.eq.s32.totalorder %s25, 0
      %p46 = por %p44, %p45
      %p47 = scmp.ne.s32.totalorder %s33, %s34
      %p48 = scmp.eq.s32.totalorder %s26, 1
      %p49 = por %p47, %p48
      %p51 = scmp.ne.s32.totalorder %s34, %s50
      %p52 = scmp.eq.s32.totalorder %s26, 0
      %p53 = por %p51, %p52
      %s55 = sadd.s32 %s54, 1
      %p58 = scmp.eq.s32.totalorder %s20, 1
      %p59 = scmp.ne.s32.totalorder %s54, %s56
      %p60 = scmp.eq.s32.totalorder %s20, 0
      %p61 = por %p59, %p60
      %p62 = scmp.ne.s32.totalorder %s54, %s56
      %p63 = scmp.eq.s32.totalorder %s25, 1
      %p64 = por %p62, %p63
      %p65 = scmp.ne.s32.totalorder %s56, %s57
      %p66 = scmp.eq.s32.totalorder %s25, 0
      %p67 = por %p65, %p66
      %p68 = scmp.ne.s32.totalorder %s56, %s57
      %p69 = scmp.eq.s32.totalorder %s26, 1
      %p70 = por %p68, %p69
      %p72 = scmp.ne.s32.totalorder %s57, %s71
      %p73 = scmp.eq.s32.totalorder %s26, 0
      %p74 = por %p72, %p73
      %s76 = sadd.s32 %s75, 1
      %p79 = scmp.eq.s32.totalorder %s20, 1
      %p80 = scmp.ne.s32.totalorder %s75, %s77
      %p81 = scmp.eq.s32.totalorder %s20, 0
      %p82 = por %p80, %p81
      %p83 = scmp.ne.s32.totalorder %s75, %s77
      %p84 = scmp.eq.s32.totalorder %s25, 1
      %p85 = por %p83, %p84
      %p86 = scmp.ne.s32.totalorder %s77, %s78
      %p87 = scmp.eq.s32.totalorder %s25, 0
      %p88 = por %p86, %p87
      %p89 = scmp.ne.s32.totalorder %s77, %s78
      %p90 = scmp.eq.s32.totalorder %s26, 1
      %p91 = por %p89, %p90
      %p93 = scmp.ne.s32.totalorder %s78, %s92
      %p94 = scmp.eq.s32.totalorder %s26, 0
      %p95 = por %p93, %p94
      %s97 = sadd.s32 %s96, 1
      %p100 = scmp.eq.s32.totalorder %s20, 1
      %p101 = scmp.ne.s32.totalorder %s96, %s98
      %p102 = scmp.eq.s32.totalorder %s20, 0
      %p103 = por %p101, %p102
      %p104 = scmp.ne.s32.totalorder %s96, %s98
      %p105 = scmp.eq.s32.totalorder %s25, 1
      %p106 = por %p104, %p105
      %p107 = scmp.ne.s32.totalorder %s98, %s99
      %p108 = scmp.eq.s32.totalorder %s25, 0
      %p109 = por %p107, %p108
      %p110 = scmp.ne.s32.totalorder %s98, %s99
      %p111 = scmp.eq.s32.totalorder %s26, 1
      %p112 = por %p110, %p111
      %p114 = scmp.ne.s32.totalorder %s99, %s113
      %p115 = scmp.eq.s32.totalorder %s26, 0
      %p116 = por %p114, %p115
      %s118 = sadd.s32 %s117, 1
      %p121 = scmp.eq.s32.totalorder %s20, 1
      %p122 = scmp.ne.s32.totalorder %s117, %s119
      %p123 = scmp.eq.s32.totalorder %s20, 0
      %p124 = por %p122, %p123
      %p125 = scmp.ne.s32.totalorder %s117, %s119
      %p126 = scmp.eq.s32.totalorder %s25, 1
      %p127 = por %p125, %p126
      %p128 = scmp.ne.s32.totalorder %s119, %s120
      %p129 = scmp.eq.s32.totalorder %s25, 0
      %p130 = por %p128, %p129
      %p131 = scmp.ne.s32.totalorder %s119, %s120
      %p132 = scmp.eq.s32.totalorder %s26, 1
      %p133 = por %p131, %p132
      %p135 = scmp.ne.s32.totalorder %s120, %s134
      %p136 = scmp.eq.s32.totalorder %s26, 0
      %p137 = por %p135, %p136
      %s139 = sadd.s32 %s138, 1
      %p142 = scmp.eq.s32.totalorder %s20, 1
      %p143 = scmp.ne.s32.totalorder %s138, %s140
      %p144 = scmp.eq.s32.totalorder %s20, 0
      %p145 = por %p143, %p144
      %p146 = scmp.ne.s32.totalorder %s138, %s140
      %p147 = scmp.eq.s32.totalorder %s25, 1
      %p148 = por %p146, %p147
      %p149 = scmp.ne.s32.totalorder %s140, %s141
      %p150 = scmp.eq.s32.totalorder %s25, 0
      %p151 = por %p149, %p150
      %p152 = scmp.ne.s32.totalorder %s140, %s141
      %p153 = scmp.eq.s32.totalorder %s26, 1
      %p154 = por %p152, %p153
      %p156 = scmp.ne.s32.totalorder %s141, %s155
      %p157 = scmp.eq.s32.totalorder %s26, 0
      %p158 = por %p156, %p157
      %s160 = sadd.s32 %s159, 1
      %p163 = scmp.eq.s32.totalorder %s20, 1
      %p164 = scmp.ne.s32.totalorder %s159, %s161
      %p165 = scmp.eq.s32.totalorder %s20, 0
      %p166 = por %p164, %p165
      %p167 = scmp.ne.s32.totalorder %s159, %s161
      %p168 = scmp.eq.s32.totalorder %s25, 1
      %p169 = por %p167, %p168
      %p170 = scmp.ne.s32.totalorder %s161, %s162
      %p171 = scmp.eq.s32.totalorder %s25, 0
      %p172 = por %p170, %p171
      %p173 = scmp.ne.s32.totalorder %s161, %s162
      %p174 = scmp.eq.s32.totalorder %s26, 1
      %p175 = por %p173, %p174
      %p177 = scmp.ne.s32.totalorder %s162, %s176
      %p178 = scmp.eq.s32.totalorder %s26, 0
      %p179 = por %p177, %p178
      %s181 = sadd.s32 %s180, 1
      %p184 = scmp.eq.s32.totalorder %s20, 1
      %p185 = scmp.ne.s32.totalorder %s180, %s182
      %p186 = scmp.eq.s32.totalorder %s20, 0
      %p187 = por %p185, %p186
      %p188 = scmp.ne.s32.totalorder %s180, %s182
      %p189 = scmp.eq.s32.totalorder %s25, 1
      %p190 = por %p188, %p189
      %p191 = scmp.ne.s32.totalorder %s182, %s183
      %p192 = scmp.eq.s32.totalorder %s25, 0
      %p193 = por %p191, %p192
      %p194 = scmp.ne.s32.totalorder %s182, %s183
      %p195 = scmp.eq.s32.totalorder %s26, 1
      %p196 = por %p194, %p195
      %p198 = scmp.ne.s32.totalorder %s183, %s197
      %p199 = scmp.eq.s32.totalorder %s26, 0
      %p200 = por %p198, %p199
      %s201 = ssub.s32 %s20, %s27
      %p202 = scmp.eq.s32.totalorder %s201, 0
      %s204 = sadd.s32 %s203, 1
      %s205 = scalar_select %p202, %s203, %s204
      %p208 = pneg %p202
      %p209 = scmp.eq.s32.totalorder %s20, 1
      %p210 = por %p208, %p209
      %p211 = scmp.ne.s32.totalorder %s203, %s206
      %p212 = scmp.eq.s32.totalorder %s20, 0
      %p213 = por %p211, %p212
      %p214 = scmp.ne.s32.totalorder %s203, %s206
      %p215 = scmp.eq.s32.totalorder %s25, 1
      %p216 = por %p214, %p215
      %p217 = scmp.ne.s32.totalorder %s206, %s207
      %p218 = scmp.eq.s32.totalorder %s25, 0
      %p219 = por %p217, %p218
      %p220 = scmp.ne.s32.totalorder %s206, %s207
      %p221 = scmp.eq.s32.totalorder %s26, 1
      %p222 = por %p220, %p221
      %p224 = scmp.ne.s32.totalorder %s207, %s223
      %p225 = scmp.eq.s32.totalorder %s26, 0
      %p226 = por %p224, %p225
      %p227 = scmp.le.s32.totalorder 1, %s20
      %p228 = scmp.lt.s32.totalorder %s20, 3
      %p229 = pnand %p227, %p228
      %p230 = pneg %p229
      // Predicated region
      $region9: #{tpu_custom_call.1} parent=5 // pred_check
        _
      $region10: #{tpu_custom_call.1} parent=5 // pred_check_branch
        %232 = sbr.rel (%p229) target = $region12
      $region11: #{tpu_custom_call.1} parent=5 // pred_region
        %s233 = ssub.s32 %s20, 1
        // Predicated region
        $region13: #{tpu_custom_call.1} parent=11 // pred_check
          %p234 = pneg %p67
        $region14: #{tpu_custom_call.1} parent=11 // pred_check_branch
          %236 = sbr.rel (%p234) target = $region16
        $region15: #{tpu_custom_call.1} parent=11 // pred_region
          _
        $region16: #{tpu_custom_call.1} parent=11 // pred_fallthru
          _
        // Predicated region
        $region17: #{tpu_custom_call.1} parent=11 // pred_check
          %p237 = pneg %p88
        $region18: #{tpu_custom_call.1} parent=11 // pred_check_branch
          %239 = sbr.rel (%p237) target = $region20
        $region19: #{tpu_custom_call.1} parent=11 // pred_region
          _
        $region20: #{tpu_custom_call.1} parent=11 // pred_fallthru
          _
        // Predicated region
        $region21: #{tpu_custom_call.1} parent=11 // pred_check
          %p240 = pneg %p109
        $region22: #{tpu_custom_call.1} parent=11 // pred_check_branch
          %242 = sbr.rel (%p240) target = $region24
        $region23: #{tpu_custom_call.1} parent=11 // pred_region
          _
        $region24: #{tpu_custom_call.1} parent=11 // pred_fallthru
          _
        // Predicated region
        $region25: #{tpu_custom_call.1} parent=11 // pred_check
          %p243 = pneg %p130
        $region26: #{tpu_custom_call.1} parent=11 // pred_check_branch
          %245 = sbr.rel (%p243) target = $region28
        $region27: #{tpu_custom_call.1} parent=11 // pred_region
          _
        $region28: #{tpu_custom_call.1} parent=11 // pred_fallthru
          _
        // Predicated region
        $region29: #{tpu_custom_call.1} parent=11 // pred_check
          %p246 = pneg %p151
        $region30: #{tpu_custom_call.1} parent=11 // pred_check_branch
          %248 = sbr.rel (%p246) target = $region32
        $region31: #{tpu_custom_call.1} parent=11 // pred_region
          _
        $region32: #{tpu_custom_call.1} parent=11 // pred_fallthru
          _
        // Predicated region
        $region33: #{tpu_custom_call.1} parent=11 // pred_check
          %p249 = pneg %p172
        $region34: #{tpu_custom_call.1} parent=11 // pred_check_branch
          %251 = sbr.rel (%p249) target = $region36
        $region35: #{tpu_custom_call.1} parent=11 // pred_region
          _
        $region36: #{tpu_custom_call.1} parent=11 // pred_fallthru
          _
        // Predicated region
        $region37: #{tpu_custom_call.1} parent=11 // pred_check
          %p252 = pneg %p193
        $region38: #{tpu_custom_call.1} parent=11 // pred_check_branch
          %254 = sbr.rel (%p252) target = $region40
        $region39: #{tpu_custom_call.1} parent=11 // pred_region
          _
        $region40: #{tpu_custom_call.1} parent=11 // pred_fallthru
          _
      $region12: #{tpu_custom_call.1} parent=5 // pred_fallthru
        _
      %p255 = scmp.lt.s32.totalorder %s20, 2
      // Predicated region
      $region41: #{tpu_custom_call.1} parent=5 // pred_check
        %p256 = pneg %p255
      $region42: #{tpu_custom_call.1} parent=5 // pred_check_branch
        %258 = sbr.rel (%p256) target = $region44
      $region43: #{tpu_custom_call.1} parent=5 // pred_region
        // Predicated region
        $region45: #{tpu_custom_call.1} parent=43 // pred_check
          %p259 = pneg %p40
        $region46: #{tpu_custom_call.1} parent=43 // pred_check_branch
          %261 = sbr.rel (%p259) target = $region48
        $region47: #{tpu_custom_call.1} parent=43 // pred_region
          %s262 = sand.u32 %s30, 1
          %s263 = scalar_lea.sflag [#allocation4], %s262
          %s264 = sand.u32 %s30, 1
          %s265 = smul.addr %s264, 24
          %s266 = scalar_lea.vmem [#allocation3], %s265
          %s268 = ssub.s32 384, 384
          %269 = vsyncadd %s263, %s268
          %s270 = smul.addr %s20, 3
          %s271 = smul.addr %s270, 128
          %s272 = scalar_lea.hbm %s0, %s271
          %s274 = sshll.u32 %s266, 4
          %s275 = int_to_ptr.vmem [resolvable:$true] %s274
          %277 = dma.hbm_to_vmem [thread:$0]  %s272, 384, %s275, %s263
        $region48: #{tpu_custom_call.1} parent=43 // pred_fallthru
          _
      $region44: #{tpu_custom_call.1} parent=5 // pred_fallthru
        _
      %p278 = scmp.le.s32.totalorder 1, %s20
      %p279 = scmp.lt.s32.totalorder %s20, 3
      %p280 = pnand %p278, %p279
      %p281 = pneg %p280
      // Predicated region
      $region49: #{tpu_custom_call.1} parent=5 // pred_check
        _
      $region50: #{tpu_custom_call.1} parent=5 // pred_check_branch
        %283 = sbr.rel (%p280) target = $region52
      $region51: #{tpu_custom_call.1} parent=5 // pred_region
        %s284 = ssub.s32 %s20, 1
        %s285 = sand.u32 %s33, 1
        %s286 = scalar_lea.sflag [#allocation4], %s285
        %s287 = sand.u32 %s33, 1
        %s288 = smul.addr %s287, 24
        %s289 = scalar_lea.vmem [#allocation3], %s288
        // Predicated region
        $region53: #{tpu_custom_call.1} parent=51 // pred_check
          %p290 = pneg %p46
        $region54: #{tpu_custom_call.1} parent=51 // pred_check_branch
          %292 = sbr.rel (%p290) target = $region56
        $region55: #{tpu_custom_call.1} parent=51 // pred_region
          %293 = dma.done %s286, 384
        $region56: #{tpu_custom_call.1} parent=51 // pred_fallthru
          _
        %s294 = sand.u32 %s33, 1
        %s295 = scalar_lea.sflag [#allocation4], %s294
        %s296 = sand.u32 %s33, 1
        %s297 = smul.addr %s296, 24
        %s298 = scalar_lea.vmem [#allocation3], %s297
        %p299 = pneg %p46
        %p300 = pneg %p43
        %p301 = pneg %p67
        %p302 = pneg %p64
        %p303 = pneg %p88
        %p304 = pneg %p85
        %p305 = pneg %p109
        %p306 = pneg %p106
        %p307 = pneg %p130
        %p308 = pneg %p127
        %p309 = pneg %p151
        %p310 = pneg %p148
        %p311 = pneg %p172
        %p312 = pneg %p169
        %p313 = pneg %p193
        %p314 = pneg %p190
        %p315 = pneg %p219
        %p316 = pneg %p216
        %s317 = sand.u32 %s206, 1
        %s318 = scalar_lea.sflag [#allocation5], %s317
        %s319 = sand.u32 %s206, 1
        %s320 = smul.addr %s319, 24
        %s321 = scalar_lea.vmem [#allocation6], %s320
        %v322 = vld [vmem:[%s1] sm:$0x7]
        %v323 = vld [vmem:[%s289] sm:$0xff]
        %v324 = vld [vmem:[%s289 + $0x8] sm:$0xff]
        %v325 = vld [vmem:[%s289 + $0x10] sm:$0xff]
        %329 = vrot.lane.b32.xlu0 %v323, 127
        %v330 = vpop.permute.xlu0 %329
        %331 = vrot.lane.b32.xlu0 %v324, 127
        %v332 = vpop.permute.xlu0 %331
        %333 = vrot.lane.b32.xlu0 %v325, 127
        %v334 = vpop.permute.xlu0 %333
        %vm335 = vcmask 1039360
        %v336 = vsel %vm335, %v330, %v332
        %v337 = vsel %vm335, %v332, %v334
        %341 = vrot.lane.b32.xlu0 %v323, 126
        %v342 = vpop.permute.xlu0 %341
        %343 = vrot.lane.b32.xlu0 %v324, 126
        %v344 = vpop.permute.xlu0 %343
        %345 = vrot.lane.b32.xlu0 %v325, 126
        %v346 = vpop.permute.xlu0 %345
        %vm347 = vcmask 1031168
        %v348 = vsel %vm347, %v342, %v344
        %v349 = vsel %vm347, %v344, %v346
        %353 = vrot.lane.b32.xlu0 %v323, 110
        %v354 = vpop.permute.xlu0 %353
        %355 = vrot.lane.b32.xlu0 %v324, 110
        %v356 = vpop.permute.xlu0 %355
        %357 = vrot.lane.b32.xlu0 %v325, 110
        %v358 = vpop.permute.xlu0 %357
        %vm359 = vcmask 900096
        %v360 = vsel %vm359, %v354, %v356
        %v361 = vsel %vm359, %v356, %v358
        %365 = vrot.lane.b32.xlu0 %v323, 109
        %v366 = vpop.permute.xlu0 %365
        %367 = vrot.lane.b32.xlu0 %v324, 109
        %v368 = vpop.permute.xlu0 %367
        %369 = vrot.lane.b32.xlu0 %v325, 109
        %v370 = vpop.permute.xlu0 %369
        %vm371 = vcmask 891904
        %v372 = vsel %vm371, %v366, %v368
        %v373 = vsel %vm371, %v368, %v370
        %377 = vrot.lane.b32.xlu0 %v323, 108
        %v378 = vpop.permute.xlu0 %377
        %379 = vrot.lane.b32.xlu0 %v324, 108
        %v380 = vpop.permute.xlu0 %379
        %381 = vrot.lane.b32.xlu0 %v325, 108
        %v382 = vpop.permute.xlu0 %381
        %vm383 = vcmask 883712
        %v384 = vsel %vm383, %v378, %v380
        %v385 = vsel %vm383, %v380, %v382
        %389 = vrot.lane.b32.xlu0 %v323, 92
        %v390 = vpop.permute.xlu0 %389
        %391 = vrot.lane.b32.xlu0 %v324, 92
        %v392 = vpop.permute.xlu0 %391
        %393 = vrot.lane.b32.xlu0 %v325, 92
        %v394 = vpop.permute.xlu0 %393
        %vm395 = vcmask 752640
        %v396 = vsel %vm395, %v390, %v392
        %v397 = vsel %vm395, %v392, %v394
        %401 = vrot.lane.b32.xlu0 %v323, 91
        %v402 = vpop.permute.xlu0 %401
        %403 = vrot.lane.b32.xlu0 %v324, 91
        %v404 = vpop.permute.xlu0 %403
        %405 = vrot.lane.b32.xlu0 %v325, 91
        %v406 = vpop.permute.xlu0 %405
        %vm407 = vcmask 744448
        %v408 = vsel %vm407, %v402, %v404
        %v409 = vsel %vm407, %v404, %v406
        %413 = vrot.lane.b32.xlu0 %v323, 90
        %v414 = vpop.permute.xlu0 %413
        %415 = vrot.lane.b32.xlu0 %v324, 90
        %v416 = vpop.permute.xlu0 %415
        %417 = vrot.lane.b32.xlu0 %v325, 90
        %v418 = vpop.permute.xlu0 %417
        %vm419 = vcmask 736256
        %v420 = vsel %vm419, %v414, %v416
        %v421 = vsel %vm419, %v416, %v418
        %v425 = vld [vmem:[%s2] sm:$0xff]
        %vm426 = vcmask 588800
        %v428 = vsel %vm426, %v425, 0
        %430 = vmatprep.subr.mxu0 %v324
        %431 = vmatpush1.msra.mxu0 %v323
        %432 = vmatprep.subr.mxu0 %v337
        %433 = vmatpush1.msra.mxu0 %v336
        %434 = vmatprep.subr.mxu0 %v349
        %435 = vmatpush1.msra.mxu0 %v348
        %436 = vmatprep.subr.mxu0 %v361
        %437 = vmatpush1.msra.mxu0 %v360
        %438 = vmatprep.subr.mxu0 %v373
        %439 = vmatpush1.msra.mxu0 %v372
        %440 = vmatprep.subr.mxu0 %v385
        %441 = vmatpush1.msra.mxu0 %v384
        %442 = vmatprep.subr.mxu0 %v397
        %443 = vmatpush1.msra.mxu0 %v396
        %444 = vmatprep.subr.mxu0 %v409
        %445 = vmatpush1.msra.mxu0 %v408
        %446 = vmatprep.subr.mxu0 %v421
        %447 = vmatpush1.msra.mxu0 %v420
        %448 = vmatprep.subr.mxu0 0.0
        %449 = vmatpush1.msra.mxu0 0.0
        %450 = vmatprep.subr.mxu0 0.0
        %451 = vmatpush1.msra.mxu0 0.0
        %452 = vmatprep.subr.mxu0 0.0
        %453 = vmatpush1.msra.mxu0 0.0
        %454 = vmatprep.subr.mxu0 0.0
        %455 = vmatpush1.msra.mxu0 0.0
        %456 = vmatprep.subr.mxu0 0.0
        %457 = vmatpush1.msra.mxu0 0.0
        %458 = vmatprep.subr.mxu0 0.0
        %459 = vmatpush1.msra.mxu0 0.0
        %460 = vmatprep.subr.mxu0 0.0
        %461 = vmatpush1.msra.mxu0 0.0
        %462 = vmatprep.subr.mxu0 0.0
        %463 = vmatpush1.msra.mxu0 0.0
        %464 = vmatprep.subr.mxu0 0.0
        %465 = vmatpush1.msra.mxu0 0.0
        %466 = vmatprep.subr.mxu0 0.0
        %467 = vmatpush1.msra.mxu0 0.0
        %468 = vmatprep.subr.mxu0 0.0
        %469 = vmatpush1.msra.mxu0 0.0
        %470 = vmatprep.subr.mxu0 0.0
        %471 = vmatpush1.msra.mxu0 0.0
        %472 = vmatprep.subr.mxu0 0.0
        %473 = vmatpush1.msra.mxu0 0.0
        %474 = vmatprep.subr.mxu0 0.0
        %475 = vmatpush1.msra.mxu0 0.0
        %476 = vmatprep.subr.mxu0 0.0
        %477 = vmatpush1.msra.mxu0 0.0
        %478 = vmatprep.subr.mxu0 0.0
        %479 = vmatpush1.msra.mxu0 0.0
        %480 = vmatprep.subr.mxu0 0.0
        %481 = vmatpush1.msra.mxu0 0.0
        %482 = vmatprep.subr.mxu0 0.0
        %483 = vmatpush1.msra.mxu0 0.0
        %484 = vmatprep.subr.mxu0 0.0
        %485 = vmatpush1.msra.mxu0 0.0
        %486 = vmatprep.subr.mxu0 0.0
        %487 = vmatpush1.msra.mxu0 0.0
        %488 = vmatprep.subr.mxu0 0.0
        %489 = vmatpush1.msra.mxu0 0.0
        %490 = vmatprep.subr.mxu0 0.0
        %491 = vmatpush1.msra.mxu0 0.0
        %492 = vmatprep.subr.mxu0 0.0
        %493 = vmatpush1.msra.mxu0 0.0
        %494 = vmatprep.mubr.f32.mxu0 0.0
        %495 = vmatmul.mubr.f32.gmra.mrb[0].mxu0 %v428
        %v496 = vpop.f32.mrb[0].mxu0
        %v497 = vadd.f32 0.0, %v496
        %v498 = vpop.f32.mrb[0].mxu0
        %v499 = vadd.f32 0.0, %v498
        %500 = vdwg.mxu0
        %501 = vmatprep.subr.mxu0 0.0
        %502 = vmatpush1.msra.mxu0 %v325
        %503 = vmatprep.subr.mxu0 0.0
        %504 = vmatpush1.msra.mxu0 %v334
        %505 = vmatprep.subr.mxu0 0.0
        %506 = vmatpush1.msra.mxu0 %v346
        %507 = vmatprep.subr.mxu0 0.0
        %508 = vmatpush1.msra.mxu0 %v358
        %509 = vmatprep.subr.mxu0 0.0
        %510 = vmatpush1.msra.mxu0 %v370
        %511 = vmatprep.subr.mxu0 0.0
        %512 = vmatpush1.msra.mxu0 %v382
        %513 = vmatprep.subr.mxu0 0.0
        %514 = vmatpush1.msra.mxu0 %v394
        %515 = vmatprep.subr.mxu0 0.0
        %516 = vmatpush1.msra.mxu0 %v406
        %517 = vmatprep.subr.mxu0 0.0
        %518 = vmatpush1.msra.mxu0 %v418
        %519 = vmatprep.subr.mxu0 0.0
        %520 = vmatpush1.msra.mxu0 0.0
        %521 = vmatprep.subr.mxu0 0.0
        %522 = vmatpush1.msra.mxu0 0.0
        %523 = vmatprep.subr.mxu0 0.0
        %524 = vmatpush1.msra.mxu0 0.0
        %525 = vmatprep.subr.mxu0 0.0
        %526 = vmatpush1.msra.mxu0 0.0
        %527 = vmatprep.subr.mxu0 0.0
        %528 = vmatpush1.msra.mxu0 0.0
        %529 = vmatprep.subr.mxu0 0.0
        %530 = vmatpush1.msra.mxu0 0.0
        %531 = vmatprep.subr.mxu0 0.0
        %532 = vmatpush1.msra.mxu0 0.0
        %533 = vmatprep.subr.mxu0 0.0
        %534 = vmatpush1.msra.mxu0 0.0
        %535 = vmatprep.subr.mxu0 0.0
        %536 = vmatpush1.msra.mxu0 0.0
        %537 = vmatprep.subr.mxu0 0.0
        %538 = vmatpush1.msra.mxu0 0.0
        %539 = vmatprep.subr.mxu0 0.0
        %540 = vmatpush1.msra.mxu0 0.0
        %541 = vmatprep.subr.mxu0 0.0
        %542 = vmatpush1.msra.mxu0 0.0
        %543 = vmatprep.subr.mxu0 0.0
        %544 = vmatpush1.msra.mxu0 0.0
        %545 = vmatprep.subr.mxu0 0.0
        %546 = vmatpush1.msra.mxu0 0.0
        %547 = vmatprep.subr.mxu0 0.0
        %548 = vmatpush1.msra.mxu0 0.0
        %549 = vmatprep.subr.mxu0 0.0
        %550 = vmatpush1.msra.mxu0 0.0
        %551 = vmatprep.subr.mxu0 0.0
        %552 = vmatpush1.msra.mxu0 0.0
        %553 = vmatprep.subr.mxu0 0.0
        %554 = vmatpush1.msra.mxu0 0.0
        %555 = vmatprep.subr.mxu0 0.0
        %556 = vmatpush1.msra.mxu0 0.0
        %557 = vmatprep.subr.mxu0 0.0
        %558 = vmatpush1.msra.mxu0 0.0
        %559 = vmatprep.subr.mxu0 0.0
        %560 = vmatpush1.msra.mxu0 0.0
        %561 = vmatprep.subr.mxu0 0.0
        %562 = vmatpush1.msra.mxu0 0.0
        %563 = vmatprep.subr.mxu0 0.0
        %564 = vmatpush1.msra.mxu0 0.0
        %565 = vmatprep.mubr.f32.mxu0 0.0
        %566 = vmatmul.mubr.f32.gmra.mrb[0].mxu0 %v428
        %v567 = vpop.f32.mrb[0].mxu0
        %v568 = vadd.f32 0.0, %v567
        %v569 = vpop.f32.mrb[0].mxu0
        %570 = vdwg.mxu0
        %v572 = vlaneseq
        %v573 = vshrl.u32 %v572, 7
        %v574 = vsub.s32 0, %v573
        %v575 = vrot.slane %v322, %v574
        %v576 = vlaneseq
        %v577 = vshrl.u32 %v576, 7
        %v578 = vsub.s32 1, %v577
        %v579 = vrot.slane %v322, %v578
        %v580 = vlaneseq
        %v581 = vshrl.u32 %v580, 7
        %v582 = vsub.s32 2, %v581
        %v583 = vrot.slane %v322, %v582
        %v587 = vmul.f32 %v497, %v575
        %v588 = vmul.f32 %v499, %v579
        %v589 = vmul.f32 %v568, %v583
        %v590 = vadd.f32 %v587, %v588
        %vm591 = vcmask 261120
        %v592 = vsel %vm591, %v589, 0.0
        %v593 = vadd.f32 %v590, %v592
        %594 = vadd.xlane.f32.xlu0 %v593
        %v595 = vpop.xlane.xlu0 %594
        %v596 = vmul.f32 %v595, 0.00390625
        %v597 = vmul.f32 %v587, %v497
        %v598 = vmul.f32 %v588, %v499
        %v599 = vmul.f32 %v589, %v568
        %v600 = vadd.f32 %v597, %v598
        %v601 = vsel %vm591, %v599, 0.0
        %v602 = vadd.f32 %v600, %v601
        %603 = vadd.xlane.f32.xlu0 %v602
        %v604 = vpop.xlane.xlu0 %603
        %v605 = vmul.f32 %v604, 0.00390625
        %v606 = vmul.f32 %v596, %v596
        %v607 = vsub.f32 %v605, %v606
        %v608 = vld [vmem:[%s3] sm:$0xff]
        %v609 = vadd.f32 %v607, 1e-05
        %v610 = vrsqrt.pop %v609
        %v611 = vmul.f32 %v608, %v610
        %v612 = vld [vmem:[%s4] sm:$0xff]
        %v613 = vmul.f32 %v596, %v611
        %v614 = vsub.f32 %v612, %v613
        %616 = vset.pattern.permute.xlu0 0
        %617 = vperm.xlu0 %616, %v611
        %v618 = vpop.permute.xlu0 %617
        %v620 = vmul.f32 %v497, %v618
        %v621 = vmul.f32 %v499, %v618
        %v622 = vmul.f32 %v568, %v618
        %624 = vset.pattern.permute.xlu0 0
        %625 = vperm.xlu0 %624, %v614
        %v626 = vpop.permute.xlu0 %625
        %v628 = vadd.f32 %v620, %v626
        %v629 = vadd.f32 %v621, %v626
        %v630 = vadd.f32 %v622, %v626
        %v631 = vmax.f32 %v628, 0.0
        %v632 = vmax.f32 %v629, 0.0
        %v633 = vmax.f32 %v630, 0.0
        %v634 = vmul.f32 %v631, %v575
        %v635 = vmul.f32 %v632, %v579
        %v636 = vmul.f32 %v633, %v583
        %vm637 = vcmask 154624
        %638 = vst.msk [vmem:[#allocation2] sm:$0xff] %vm637, 0.0
        %642 = vrot.lane.b32.xlu0 %v634, 19
        %v643 = vpop.permute.xlu0 %642
        %644 = vrot.lane.b32.xlu0 %v635, 19
        %v645 = vpop.permute.xlu0 %644
        %646 = vrot.lane.b32.xlu0 %v636, 19
        %v647 = vpop.permute.xlu0 %646
        %v648 = vsel %vm637, %v643, %v645
        %v649 = vsel %vm637, %v645, %v647
        %vm653 = vcmask 1047704
        %654 = vst.msk [vmem:[#allocation2] sm:$0xff] %vm653, %v643
        %655 = vst [vmem:[#allocation2 + $0x8] sm:$0xff] %v648
        %vm656 = vcmask 416768
        %657 = vst.msk [vmem:[#allocation2 + $0x10] sm:$0xff] %vm656, %v649
        %vm658 = vcmask 572824
        %659 = vst.msk [vmem:[#allocation2 + $0x10] sm:$0xff] %vm658, 0.0
        %v660 = vld [vmem:[#allocation2] sm:$0xff]
        %v661 = vld [vmem:[#allocation2 + $0x8] sm:$0xff]
        %v662 = vld [vmem:[#allocation2 + $0x10] sm:$0xff]
        %666 = vrot.lane.b32.xlu0 %v660, 127
        %v667 = vpop.permute.xlu0 %666
        %668 = vrot.lane.b32.xlu0 %v661, 127
        %v669 = vpop.permute.xlu0 %668
        %670 = vrot.lane.b32.xlu0 %v662, 127
        %v671 = vpop.permute.xlu0 %670
        %v672 = vsel %vm335, %v667, %v669
        %v673 = vsel %vm335, %v669, %v671
        %677 = vrot.lane.b32.xlu0 %v660, 126
        %v678 = vpop.permute.xlu0 %677
        %679 = vrot.lane.b32.xlu0 %v661, 126
        %v680 = vpop.permute.xlu0 %679
        %681 = vrot.lane.b32.xlu0 %v662, 126
        %v682 = vpop.permute.xlu0 %681
        %v683 = vsel %vm347, %v678, %v680
        %v684 = vsel %vm347, %v680, %v682
        %688 = vrot.lane.b32.xlu0 %v660, 110
        %v689 = vpop.permute.xlu0 %688
        %690 = vrot.lane.b32.xlu0 %v661, 110
        %v691 = vpop.permute.xlu0 %690
        %692 = vrot.lane.b32.xlu0 %v662, 110
        %v693 = vpop.permute.xlu0 %692
        %v694 = vsel %vm359, %v689, %v691
        %v695 = vsel %vm359, %v691, %v693
        %699 = vrot.lane.b32.xlu0 %v660, 109
        %v700 = vpop.permute.xlu0 %699
        %701 = vrot.lane.b32.xlu0 %v661, 109
        %v702 = vpop.permute.xlu0 %701
        %703 = vrot.lane.b32.xlu0 %v662, 109
        %v704 = vpop.permute.xlu0 %703
        %v705 = vsel %vm371, %v700, %v702
        %v706 = vsel %vm371, %v702, %v704
        %710 = vrot.lane.b32.xlu0 %v660, 108
        %v711 = vpop.permute.xlu0 %710
        %712 = vrot.lane.b32.xlu0 %v661, 108
        %v713 = vpop.permute.xlu0 %712
        %714 = vrot.lane.b32.xlu0 %v662, 108
        %v715 = vpop.permute.xlu0 %714
        %v716 = vsel %vm383, %v711, %v713
        %v717 = vsel %vm383, %v713, %v715
        %721 = vrot.lane.b32.xlu0 %v660, 92
        %v722 = vpop.permute.xlu0 %721
        %723 = vrot.lane.b32.xlu0 %v661, 92
        %v724 = vpop.permute.xlu0 %723
        %725 = vrot.lane.b32.xlu0 %v662, 92
        %v726 = vpop.permute.xlu0 %725
        %v727 = vsel %vm395, %v722, %v724
        %v728 = vsel %vm395, %v724, %v726
        %732 = vrot.lane.b32.xlu0 %v660, 91
        %v733 = vpop.permute.xlu0 %732
        %734 = vrot.lane.b32.xlu0 %v661, 91
        %v735 = vpop.permute.xlu0 %734
        %736 = vrot.lane.b32.xlu0 %v662, 91
        %v737 = vpop.permute.xlu0 %736
        %v738 = vsel %vm407, %v733, %v735
        %v739 = vsel %vm407, %v735, %v737
        %743 = vrot.lane.b32.xlu0 %v660, 90
        %v744 = vpop.permute.xlu0 %743
        %745 = vrot.lane.b32.xlu0 %v661, 90
        %v746 = vpop.permute.xlu0 %745
        %747 = vrot.lane.b32.xlu0 %v662, 90
        %v748 = vpop.permute.xlu0 %747
        %v749 = vsel %vm419, %v744, %v746
        %v750 = vsel %vm419, %v746, %v748
        %v754 = vld [vmem:[%s5] sm:$0xff]
        %v756 = vsel %vm426, %v754, 0
        %758 = vmatprep.subr.mxu0 %v661
        %759 = vmatpush1.msra.mxu0 %v660
        %760 = vmatprep.subr.mxu0 %v673
        %761 = vmatpush1.msra.mxu0 %v672
        %762 = vmatprep.subr.mxu0 %v684
        %763 = vmatpush1.msra.mxu0 %v683
        %764 = vmatprep.subr.mxu0 %v695
        %765 = vmatpush1.msra.mxu0 %v694
        %766 = vmatprep.subr.mxu0 %v706
        %767 = vmatpush1.msra.mxu0 %v705
        %768 = vmatprep.subr.mxu0 %v717
        %769 = vmatpush1.msra.mxu0 %v716
        %770 = vmatprep.subr.mxu0 %v728
        %771 = vmatpush1.msra.mxu0 %v727
        %772 = vmatprep.subr.mxu0 %v739
        %773 = vmatpush1.msra.mxu0 %v738
        %774 = vmatprep.subr.mxu0 %v750
        %775 = vmatpush1.msra.mxu0 %v749
        %776 = vmatprep.subr.mxu0 0.0
        %777 = vmatpush1.msra.mxu0 0.0
        %778 = vmatprep.subr.mxu0 0.0
        %779 = vmatpush1.msra.mxu0 0.0
        %780 = vmatprep.subr.mxu0 0.0
        %781 = vmatpush1.msra.mxu0 0.0
        %782 = vmatprep.subr.mxu0 0.0
        %783 = vmatpush1.msra.mxu0 0.0
        %784 = vmatprep.subr.mxu0 0.0
        %785 = vmatpush1.msra.mxu0 0.0
        %786 = vmatprep.subr.mxu0 0.0
        %787 = vmatpush1.msra.mxu0 0.0
        %788 = vmatprep.subr.mxu0 0.0
        %789 = vmatpush1.msra.mxu0 0.0
        %790 = vmatprep.subr.mxu0 0.0
        %791 = vmatpush1.msra.mxu0 0.0
        %792 = vmatprep.subr.mxu0 0.0
        %793 = vmatpush1.msra.mxu0 0.0
        %794 = vmatprep.subr.mxu0 0.0
        %795 = vmatpush1.msra.mxu0 0.0
        %796 = vmatprep.subr.mxu0 0.0
        %797 = vmatpush1.msra.mxu0 0.0
        %798 = vmatprep.subr.mxu0 0.0
        %799 = vmatpush1.msra.mxu0 0.0
        %800 = vmatprep.subr.mxu0 0.0
        %801 = vmatpush1.msra.mxu0 0.0
        %802 = vmatprep.subr.mxu0 0.0
        %803 = vmatpush1.msra.mxu0 0.0
        %804 = vmatprep.subr.mxu0 0.0
        %805 = vmatpush1.msra.mxu0 0.0
        %806 = vmatprep.subr.mxu0 0.0
        %807 = vmatpush1.msra.mxu0 0.0
        %808 = vmatprep.subr.mxu0 0.0
        %809 = vmatpush1.msra.mxu0 0.0
        %810 = vmatprep.subr.mxu0 0.0
        %811 = vmatpush1.msra.mxu0 0.0
        %812 = vmatprep.subr.mxu0 0.0
        %813 = vmatpush1.msra.mxu0 0.0
        %814 = vmatprep.subr.mxu0 0.0
        %815 = vmatpush1.msra.mxu0 0.0
        %816 = vmatprep.subr.mxu0 0.0
        %817 = vmatpush1.msra.mxu0 0.0
        %818 = vmatprep.subr.mxu0 0.0
        %819 = vmatpush1.msra.mxu0 0.0
        %820 = vmatprep.subr.mxu0 0.0
        %821 = vmatpush1.msra.mxu0 0.0
        %822 = vmatprep.mubr.f32.mxu0 0.0
        %823 = vmatmul.mubr.f32.gmra.mrb[0].mxu0 %v756
        %v824 = vpop.f32.mrb[0].mxu0
        %v825 = vadd.f32 0.0, %v824
        %v826 = vpop.f32.mrb[0].mxu0
        %v827 = vadd.f32 0.0, %v826
        %828 = vdwg.mxu0
        %829 = vmatprep.subr.mxu0 0.0
        %830 = vmatpush1.msra.mxu0 %v662
        %831 = vmatprep.subr.mxu0 0.0
        %832 = vmatpush1.msra.mxu0 %v671
        %833 = vmatprep.subr.mxu0 0.0
        %834 = vmatpush1.msra.mxu0 %v682
        %835 = vmatprep.subr.mxu0 0.0
        %836 = vmatpush1.msra.mxu0 %v693
        %837 = vmatprep.subr.mxu0 0.0
        %838 = vmatpush1.msra.mxu0 %v704
        %839 = vmatprep.subr.mxu0 0.0
        %840 = vmatpush1.msra.mxu0 %v715
        %841 = vmatprep.subr.mxu0 0.0
        %842 = vmatpush1.msra.mxu0 %v726
        %843 = vmatprep.subr.mxu0 0.0
        %844 = vmatpush1.msra.mxu0 %v737
        %845 = vmatprep.subr.mxu0 0.0
        %846 = vmatpush1.msra.mxu0 %v748
        %847 = vmatprep.subr.mxu0 0.0
        %848 = vmatpush1.msra.mxu0 0.0
        %849 = vmatprep.subr.mxu0 0.0
        %850 = vmatpush1.msra.mxu0 0.0
        %851 = vmatprep.subr.mxu0 0.0
        %852 = vmatpush1.msra.mxu0 0.0
        %853 = vmatprep.subr.mxu0 0.0
        %854 = vmatpush1.msra.mxu0 0.0
        %855 = vmatprep.subr.mxu0 0.0
        %856 = vmatpush1.msra.mxu0 0.0
        %857 = vmatprep.subr.mxu0 0.0
        %858 = vmatpush1.msra.mxu0 0.0
        %859 = vmatprep.subr.mxu0 0.0
        %860 = vmatpush1.msra.mxu0 0.0
        %861 = vmatprep.subr.mxu0 0.0
        %862 = vmatpush1.msra.mxu0 0.0
        %863 = vmatprep.subr.mxu0 0.0
        %864 = vmatpush1.msra.mxu0 0.0
        %865 = vmatprep.subr.mxu0 0.0
        %866 = vmatpush1.msra.mxu0 0.0
        %867 = vmatprep.subr.mxu0 0.0
        %868 = vmatpush1.msra.mxu0 0.0
        %869 = vmatprep.subr.mxu0 0.0
        %870 = vmatpush1.msra.mxu0 0.0
        %871 = vmatprep.subr.mxu0 0.0
        %872 = vmatpush1.msra.mxu0 0.0
        %873 = vmatprep.subr.mxu0 0.0
        %874 = vmatpush1.msra.mxu0 0.0
        %875 = vmatprep.subr.mxu0 0.0
        %876 = vmatpush1.msra.mxu0 0.0
        %877 = vmatprep.subr.mxu0 0.0
        %878 = vmatpush1.msra.mxu0 0.0
        %879 = vmatprep.subr.mxu0 0.0
        %880 = vmatpush1.msra.mxu0 0.0
        %881 = vmatprep.subr.mxu0 0.0
        %882 = vmatpush1.msra.mxu0 0.0
        %883 = vmatprep.subr.mxu0 0.0
        %884 = vmatpush1.msra.mxu0 0.0
        %885 = vmatprep.subr.mxu0 0.0
        %886 = vmatpush1.msra.mxu0 0.0
        %887 = vmatprep.subr.mxu0 0.0
        %888 = vmatpush1.msra.mxu0 0.0
        %889 = vmatprep.subr.mxu0 0.0
        %890 = vmatpush1.msra.mxu0 0.0
        %891 = vmatprep.subr.mxu0 0.0
        %892 = vmatpush1.msra.mxu0 0.0
        %893 = vmatprep.mubr.f32.mxu0 0.0
        %894 = vmatmul.mubr.f32.gmra.mrb[0].mxu0 %v756
        %v895 = vpop.f32.mrb[0].mxu0
        %v896 = vadd.f32 0.0, %v895
        %v897 = vpop.f32.mrb[0].mxu0
        %898 = vdwg.mxu0
        %v899 = vmul.f32 %v825, %v575
        %v900 = vmul.f32 %v827, %v579
        %v901 = vmul.f32 %v896, %v583
        %v902 = vadd.f32 %v899, %v900
        %v903 = vsel %vm591, %v901, 0.0
        %v904 = vadd.f32 %v902, %v903
        %905 = vadd.xlane.f32.xlu0 %v904
        %v906 = vpop.xlane.xlu0 %905
        %v907 = vmul.f32 %v906, 0.00390625
        %v908 = vmul.f32 %v899, %v825
        %v909 = vmul.f32 %v900, %v827
        %v910 = vmul.f32 %v901, %v896
        %v911 = vadd.f32 %v908, %v909
        %v912 = vsel %vm591, %v910, 0.0
        %v913 = vadd.f32 %v911, %v912
        %914 = vadd.xlane.f32.xlu0 %v913
        %v915 = vpop.xlane.xlu0 %914
        %v916 = vmul.f32 %v915, 0.00390625
        %v917 = vmul.f32 %v907, %v907
        %v918 = vsub.f32 %v916, %v917
        %v919 = vld [vmem:[%s6] sm:$0xff]
        %v920 = vadd.f32 %v918, 1e-05
        %v921 = vrsqrt.pop %v920
        %v922 = vmul.f32 %v919, %v921
        %v923 = vld [vmem:[%s7] sm:$0xff]
        %v924 = vmul.f32 %v907, %v922
        %v925 = vsub.f32 %v923, %v924
        %927 = vset.pattern.permute.xlu0 0
        %928 = vperm.xlu0 %927, %v922
        %v929 = vpop.permute.xlu0 %928
        %v931 = vmul.f32 %v825, %v929
        %v932 = vmul.f32 %v827, %v929
        %v933 = vmul.f32 %v896, %v929
        %935 = vset.pattern.permute.xlu0 0
        %936 = vperm.xlu0 %935, %v925
        %v937 = vpop.permute.xlu0 %936
        %v939 = vadd.f32 %v931, %v937
        %v940 = vadd.f32 %v932, %v937
        %v941 = vadd.f32 %v933, %v937
        %v942 = vld [vmem:[%s289] sm:$0xff]
        %v943 = vld [vmem:[%s289 + $0x8] sm:$0xff]
        %v944 = vld [vmem:[%s289 + $0x10] sm:$0xff]
        %948 = vrot.lane.b32.xlu0 %v939, 19
        %v949 = vpop.permute.xlu0 %948
        %950 = vrot.lane.b32.xlu0 %v940, 19
        %v951 = vpop.permute.xlu0 %950
        %952 = vrot.lane.b32.xlu0 %v941, 19
        %v953 = vpop.permute.xlu0 %952
        %v954 = vsel %vm637, %v949, %v951
        %v955 = vsel %vm637, %v951, %v953
        %v959 = vadd.f32 %v942, %v949
        %v960 = vadd.f32 %v943, %v954
        %v961 = vadd.f32 %v944, %v955
        %v962 = vmax.f32 %v959, 0.0
        %v963 = vmax.f32 %v960, 0.0
        %v964 = vmax.f32 %v961, 0.0
        %968 = vrot.lane.b32.xlu0 %v962, 109
        %v969 = vpop.permute.xlu0 %968
        %970 = vrot.lane.b32.xlu0 %v963, 109
        %v971 = vpop.permute.xlu0 %970
        %972 = vrot.lane.b32.xlu0 %v964, 109
        %v973 = vpop.permute.xlu0 %972
        %v974 = vsel %vm371, %v969, %v971
        %v975 = vsel %vm371, %v971, %v973
        %979 = vst [vmem:[%s321] sm:$0xff] %v974
        %980 = vst [vmem:[%s321 + $0x8] sm:$0xff] %v975
        %981 = vst.msk [vmem:[%s321 + $0x10] sm:$0xff] %vm591, %v973
        %s982 = sand.u32 %s206, 1
        %s983 = scalar_lea.sflag [#allocation5], %s982
        %s984 = sand.u32 %s206, 1
        %s985 = smul.addr %s984, 24
        %s986 = scalar_lea.vmem [#allocation6], %s985
        // Predicated region
        $region57: #{tpu_custom_call.1} parent=51 // pred_check
          %p987 = pneg %p216
        $region58: #{tpu_custom_call.1} parent=51 // pred_check_branch
          %989 = sbr.rel (%p987) target = $region60
        $region59: #{tpu_custom_call.1} parent=51 // pred_region
          %s991 = ssub.s32 384, 384
          %992 = vsyncadd %s983, %s991
          %s993 = smul.addr %s25, 3
          %s994 = smul.addr %s993, 128
          %s995 = scalar_lea.hbm %s8, %s994
          %s997 = sshll.u32 %s986, 4
          %s998 = int_to_ptr.vmem [resolvable:$true] %s997
          %1000 = dma.vmem_to_hbm [thread:$0]  %s998, 384, %s995, %s983
        $region60: #{tpu_custom_call.1} parent=51 // pred_fallthru
          _
      $region52: #{tpu_custom_call.1} parent=5 // pred_fallthru
        _
      %p1001 = scmp.le.s32.totalorder 2, %s20
      // Predicated region
      $region61: #{tpu_custom_call.1} parent=5 // pred_check
        %p1002 = pneg %p1001
      $region62: #{tpu_custom_call.1} parent=5 // pred_check_branch
        %1004 = sbr.rel (%p1002) target = $region64
      $region63: #{tpu_custom_call.1} parent=5 // pred_region
        %s1005 = ssub.s32 %s20, 2
        // Predicated region
        $region65: #{tpu_custom_call.1} parent=63 // pred_check
          %p1006 = pneg %p222
        $region66: #{tpu_custom_call.1} parent=63 // pred_check_branch
          %1008 = sbr.rel (%p1006) target = $region68
        $region67: #{tpu_custom_call.1} parent=63 // pred_region
          %s1009 = sand.u32 %s207, 1
          %s1010 = scalar_lea.sflag [#allocation5], %s1009
          %s1011 = sand.u32 %s207, 1
          %s1012 = smul.addr %s1011, 24
          %s1013 = scalar_lea.vmem [#allocation6], %s1012
          %1014 = dma.done %s1010, 384
        $region68: #{tpu_custom_call.1} parent=63 // pred_fallthru
          _
      $region64: #{tpu_custom_call.1} parent=5 // pred_fallthru
        _
    $region6: #{tpu_custom_call.1} parent=1 // loop_footer
      %s24 = sadd.s32 1, %s20
    $region7: #{tpu_custom_call.1} parent=1 // loop_footer_branch
      %19 = sbr.rel target = $region3
    $region8: #{tpu_custom_call.1} parent=1 // loop_exit
      _
    %1015 = vsyncpa [#allocation4], 1
    %s1016 = scalar_lea.sflag [#allocation4], 1
    %1017 = vsyncpa %s1016, 1
    %1018 = vsyncpa [#allocation5], 1
    %s1019 = scalar_lea.sflag [#allocation5], 1
    %1020 = vsyncpa %s1019, 1

</llo_original>
